<compile_context>
chip_gen: v7x
topology: tpu7x:2x2x1
jax: 0.10.0
libtpu: 0.0.40
codegen_flags: <defaults>
</compile_context>

<pallas_src>
import math

import jax
import jax.numpy as jnp
from jax.experimental import pallas as pl
from jax.experimental.pallas import tpu as pltpu


def _round_up(x, m):
    return ((x + m - 1) // m) * m


def _dice_kernel(alpha_ref, score_ref, out_ref):
    s = score_ref[...].astype(jnp.float32)          # (tile_r, lane)
    alpha = alpha_ref[...].astype(jnp.float32)      # (1, lane) -> broadcasts
    p = jax.nn.sigmoid(s)                           # EUP
    # alpha*(1-p)*s + p*s  ==  s * (alpha + p*(1-alpha))
    out_ref[...] = (s * (alpha + p * (1.0 - alpha))).astype(out_ref.dtype)


def dice(score, alpha, *, max_tile_rows=16384, target_tile_bytes=2 << 20,
         max_fold_lane=4096):
    """Dice activation. score: (..., emb_size), alpha: (emb_size,)."""
    emb = score.shape[-1]
    assert alpha.shape == (emb,)
    orig_shape = score.shape
    dtype = score.dtype
    total = 1
    for d in orig_shape:
        total *= d

    score2d = score.reshape(-1, emb)                # (rows, emb)
    rows = score2d.shape[0]
    lane = emb
    alpha_row = alpha

    # Lane-dense fold: make lane a multiple of 128 so stores are never masked.
    if emb % 128 != 0:
        fold_lane = (emb * 128) // math.gcd(emb, 128)   # lcm(emb, 128)
        if fold_lane <= max_fold_lane:
            k = fold_lane // emb
            pad_rows = (-rows) % k
            if pad_rows:
                # <= k-1 rows of padding; only needed when rows % k != 0.
                score2d = jnp.pad(score2d, ((0, pad_rows), (0, 0)))
            rows = (rows + pad_rows) // k
            lane = fold_lane
            score2d = score2d.reshape(rows, lane)
            alpha_row = jnp.tile(alpha, k)
        # else: very odd emb -> keep lane = emb (rare; masked-store fallback)

    alpha2d = alpha_row.reshape(1, lane)

    # Sublane alignment: 8 for 4-byte, 16 for 2-byte, 32 for 1-byte dtypes.
    itemsize = jnp.dtype(dtype).itemsize
    sub_align = max(8, 32 // max(itemsize, 1))

    # Row tile: ~target_tile_bytes per input tile, multiple of sub_align.
    tile_r = max(sub_align,
                 min(max_tile_rows, target_tile_bytes // max(lane * itemsize, 1)))
    tile_r = (tile_r // sub_align) * sub_align
    # Ensure >= 2 grid steps when there is enough work (v7x: 2 TCs share HBM).
    if rows > 2 * sub_align:
        half = _round_up(pl.cdiv(rows, 2), sub_align)
        tile_r = min(tile_r, half)
    # Don't allocate blocks (much) larger than the whole array.
    tile_r = min(tile_r, _round_up(rows, sub_align))
    tile_r = max(tile_r, sub_align)

    grid = (pl.cdiv(rows, tile_r),)   # partial last block handled by Pallas

    out2d = pl.pallas_call(
        _dice_kernel,
        out_shape=jax.ShapeDtypeStruct((rows, lane), dtype),
        grid=grid,
        in_specs=[
            pl.BlockSpec((1, lane), lambda i: (0, 0)),        # alpha (resident)
            pl.BlockSpec((tile_r, lane), lambda i: (i, 0)),   # score tile
        ],
        out_specs=pl.BlockSpec((tile_r, lane), lambda i: (i, 0)),
        compiler_params=pltpu.CompilerParams(
            dimension_semantics=("parallel",),
        ),
        cost_estimate=pl.CostEstimate(
            flops=6 * rows * lane,
            transcendentals=rows * lane,
            bytes_accessed=2 * rows * lane * itemsize,
        ),
    )(alpha2d, score2d)

    # Undo fold / fold-padding (only slices when padding was actually added).
    out_flat = out2d.reshape(-1)
    if out_flat.shape[0] != total:
        out_flat = out_flat[:total]
    return out_flat.reshape(orig_shape)


def _dice_ref(score, alpha):
    p = jax.nn.sigmoid(score)
    return alpha * (1.0 - p) * score + p * score


if __name__ == "__main__":
    key = jax.random.PRNGKey(0)
    k1, k2, k3, k4 = jax.random.split(key, 4)

    ok = True

    # Case 1: module-consistent shapes, alpha = zeros (module __init__ default),
    # emb=32 -> lane-folded to 128 lanes, rows divisible by fold factor.
    batch, seq, emb_size = 2, 8, 32
    score = jax.random.normal(k1, (batch, seq, emb_size), dtype=jnp.float32)
    alpha0 = jnp.zeros((emb_size,), dtype=jnp.float32)
    out = jax.block_until_ready(dice(score, alpha0))
    ok &= out.shape == score.shape
    ok &= bool(jnp.allclose(out, _dice_ref(score, alpha0), atol=1e-6, rtol=1e-6))

    # Case 2: nonzero alpha (exercises the alpha branch).
    alpha_nz = jax.random.normal(k2, (emb_size,), dtype=jnp.float32)
    out = jax.block_until_ready(dice(score, alpha_nz))
    ok &= bool(jnp.allclose(out, _dice_ref(score, alpha_nz), atol=1e-6, rtol=1e-6))

    # Case 3: rows not divisible by the fold factor -> small row pad for the
    # fold + masked partial last grid block; nonzero alpha.
    score3 = jax.random.normal(k3, (3, 5, emb_size), dtype=jnp.float32)
    out3 = jax.block_until_ready(dice(score3, alpha_nz))
    ok &= out3.shape == score3.shape
    ok &= bool(jnp.allclose(out3, _dice_ref(score3, alpha_nz), atol=1e-6, rtol=1e-6))

    # Case 4: emb already a multiple of 128 -> no fold, partial last block.
    emb4 = 128
    score4 = jax.random.normal(k4, (4, 7, emb4), dtype=jnp.float32)
    alpha4 = jax.random.normal(k2, (emb4,), dtype=jnp.float32)
    out4 = jax.block_until_ready(dice(score4, alpha4))
    ok &= out4.shape == score4.shape
    ok &= bool(jnp.allclose(out4, _dice_ref(score4, alpha4), atol=1e-6, rtol=1e-6))

    assert ok
    print("KERNEL_OK")
</pallas_src>

<mosaic_0001>
module attributes {stable_mosaic.version = 11 : i64} {
  func.func @_dice_kernel(%arg0: i32, %arg1: memref<1x128xf32, #tpu.memory_space<vmem>>, %arg2: memref<8x128xf32, #tpu.memory_space<vmem>>, %arg3: memref<8x128xf32, #tpu.memory_space<vmem>>) attributes {dimension_semantics = [#tpu.dimension_semantics<parallel>], iteration_bounds = array<i64: 1>, scalar_prefetch = 0 : i64, scratch_operands = 0 : i64, tpu.core_type = #tpu.core_type<tc>, window_params = [{pipeline_mode = #tpu.pipeline_mode<synchronous>, transform_indices = @transform_0, window_bounds = array<i64: 1, 128>}, {transform_indices = @transform_1, window_bounds = array<i64: 8, 128>}, {transform_indices = @transform_2, window_bounds = array<i64: 8, 128>}]} {
    %c0 = arith.constant 0 : index
    %c0_0 = arith.constant 0 : index
    %0 = vector.load %arg2[%c0, %c0_0] : memref<8x128xf32, #tpu.memory_space<vmem>>, vector<8x128xf32>
    %c0_1 = arith.constant 0 : index
    %c0_2 = arith.constant 0 : index
    %1 = vector.load %arg1[%c0_1, %c0_2] : memref<1x128xf32, #tpu.memory_space<vmem>>, vector<1x128xf32>
    %2 = arith.negf %0 : vector<8x128xf32>
    %3 = math.exp %2 : vector<8x128xf32>
    %cst = arith.constant 1.000000e+00 : f32
    %4 = vector.broadcast %cst : f32 to vector<8x128xf32>
    %5 = arith.addf %4, %3 : vector<8x128xf32>
    %6 = arith.divf %4, %5 : vector<8x128xf32>
    %cst_3 = arith.constant 1.000000e+00 : f32
    %7 = vector.broadcast %cst_3 : f32 to vector<1x128xf32>
    %8 = arith.subf %7, %1 : vector<1x128xf32>
    %9 = vector.broadcast %8 : vector<1x128xf32> to vector<8x128xf32>
    %10 = arith.mulf %6, %9 : vector<8x128xf32>
    %11 = vector.broadcast %1 : vector<1x128xf32> to vector<8x128xf32>
    %12 = arith.addf %11, %10 : vector<8x128xf32>
    %13 = arith.mulf %0, %12 : vector<8x128xf32>
    %c0_4 = arith.constant 0 : index
    %c0_5 = arith.constant 0 : index
    %14 = vector.load %arg3[%c0_4, %c0_5] : memref<8x128xf32, #tpu.memory_space<vmem>>, vector<8x128xf32>
    tpu.vector_store %arg3[%c0_4, %c0_5], %13 {strides = array<i32>} : memref<8x128xf32, #tpu.memory_space<vmem>>, vector<8x128xf32>,
    return
  }
  func.func @transform_0(%arg0: i32) -> (i32, i32) {
    %c0_i32 = arith.constant 0 : i32
    %c0_i32_0 = arith.constant 0 : i32
    %c0_i32_1 = arith.constant 0 : i32
    return %c0_i32, %c0_i32_0 : i32, i32
  }
  func.func @transform_1(%arg0: i32) -> (i32, i32) {
    %c0_i32 = arith.constant 0 : i32
    %c0_i32_0 = arith.constant 0 : i32
    return %arg0, %c0_i32 : i32, i32
  }
  func.func @transform_2(%arg0: i32) -> (i32, i32) {
    %c0_i32 = arith.constant 0 : i32
    %c0_i32_0 = arith.constant 0 : i32
    return %arg0, %c0_i32 : i32, i32
  }
}

</mosaic_0001>

<llo_original>
// kernel: tpu_custom_call.1
$region0: #{tpu_custom_call.1}
  #allocation0 [shape = 'u32[]', space=smem, size = 0x4, offset = 0x4, fixed_abs, tag = 'smem constant byte address 0x4 - core index']
  #allocation1 [shape = 'u32[144,128]{1,0:T(1,128)}', space=vmem, size = 0x12000, scoped, tag = 'internal scratch']
  %s0 = inlined_call_operand.hbm [shape: f32[1,128], index: 0, kind: input, shape index: {}]
  %s1 = inlined_call_operand.hbm [shape: f32[4,128], index: 1, kind: input, shape index: {}]
  %s2 = inlined_call_operand.hbm [shape: f32[4,128], index: 2, kind: output, shape index: {}]
  %s3 = sld [smem:[#allocation0]]
  $region26: #{tpu_custom_call.1} parent=0
    _
  %s5 = ssub.s32 1, %s3
  %s6 = scalar_select 0, %s5, %s3
  $region1: #{tpu_custom_call.1} parent=0
    #allocation2 [shape = 'u8[512]{0}', space=vmem, size = 0x400, scoped, tag = 'input window, operand 0, single buffered']
    #allocation3 [shape = 's32[1]{0}', space=sflag, size = 0x4, scoped, tag = 'scoped memory for tpu_custom_call.1']
    #allocation4 [shape = 's32[1]{0}', space=sflag, size = 0x4, scoped, tag = 'scoped memory for tpu_custom_call.1']
    #allocation5 [shape = 'u8[4096]{0}', space=vmem, size = 0x1000, scoped, tag = 'input window, operand 1, single buffered']
    #allocation6 [shape = 's32[1]{0}', space=sflag, size = 0x4, scoped, tag = 'scoped memory for tpu_custom_call.1']
    #allocation7 [shape = 'u8[4096]{0}', space=vmem, size = 0x1000, scoped, tag = 'output window, operand 0, single buffered']
    %7 = vsyncpa [#allocation3], 0
    %8 = vsyncpa [#allocation6], 0
    %9 = vsyncpa [#allocation4], 0
    // Predicated region
    $region2: #{tpu_custom_call.1} parent=1 // pred_check
      _
    $region3: #{tpu_custom_call.1} parent=1 // pred_check_branch
      %11 = sbr.rel (0) target = $region5
    $region4: #{tpu_custom_call.1} parent=1 // pred_region
      %s13 = ssub.s32 16, 16
      %14 = vsyncadd [#allocation3], %s13
      %s16 = sshll.u32 [#allocation2], 4
      %s17 = int_to_ptr.vmem [resolvable:$true] %s16
      %19 = dma.hbm_to_vmem [thread:$0]  %s0, 16, %s17, [#allocation3]
    $region5: #{tpu_custom_call.1} parent=1 // pred_fallthru
      _
    // Predicated region
    $region6: #{tpu_custom_call.1} parent=1 // pred_check
      _
    $region7: #{tpu_custom_call.1} parent=1 // pred_check_branch
      %21 = sbr.rel (0) target = $region9
    $region8: #{tpu_custom_call.1} parent=1 // pred_region
      %s23 = ssub.s32 128, 64
      %24 = vsyncadd [#allocation6], %s23
      %s25 = sshll.u32 [#allocation5], 4
      %s26 = int_to_ptr.vmem [resolvable:$true] %s25
      %31 = dma.hbm_to_vmem [thread:$0]  %s1, 64, %s26, [#allocation6], 64, 64, 4
    $region9: #{tpu_custom_call.1} parent=1 // pred_fallthru
      _
    // Predicated region
    $region10: #{tpu_custom_call.1} parent=1 // pred_check
      _
    $region11: #{tpu_custom_call.1} parent=1 // pred_check_branch
      %33 = sbr.rel (0) target = $region13
    $region12: #{tpu_custom_call.1} parent=1 // pred_region
      %34 = dma.done [#allocation3], 16
    $region13: #{tpu_custom_call.1} parent=1 // pred_fallthru
      _
    // Predicated region
    $region14: #{tpu_custom_call.1} parent=1 // pred_check
      _
    $region15: #{tpu_custom_call.1} parent=1 // pred_check_branch
      %36 = sbr.rel (0) target = $region17
    $region16: #{tpu_custom_call.1} parent=1 // pred_region
      %37 = dma.done [#allocation6], 128
    $region17: #{tpu_custom_call.1} parent=1 // pred_fallthru
      _
    %v38 = vld [vmem:[#allocation5] sm:$0xff]
    %v39 = vld [vmem:[#allocation2] sm:$0x1]
    %v40 = vxor.u32 %v38, 2147483648
    %v41 = vmul.f32 %v40, 1.442695
    %v42 = vpow.pop %v41
    %v43 = vadd.f32 %v42, 1.0
    %v44 = vrcp.pop %v43
    %v45 = vmul.f32 1.0, %v44
    %v46 = vsub.f32 1.0, %v39
    %v48 = vlaneseq
    %v49 = vshrl.u32 %v48, 7
    %v50 = vsub.s32 0, %v49
    %v51 = vrot.slane %v46, %v50
    %v53 = vmul.f32 %v45, %v51
    %v55 = vlaneseq
    %v56 = vshrl.u32 %v55, 7
    %v57 = vsub.s32 0, %v56
    %v58 = vrot.slane %v39, %v57
    %v60 = vadd.f32 %v58, %v53
    %v61 = vmul.f32 %v38, %v60
    %62 = vst [vmem:[#allocation7] sm:$0xff] %v61
    // Predicated region
    $region18: #{tpu_custom_call.1} parent=1 // pred_check
      _
    $region19: #{tpu_custom_call.1} parent=1 // pred_check_branch
      %64 = sbr.rel (0) target = $region21
    $region20: #{tpu_custom_call.1} parent=1 // pred_region
      %s66 = ssub.s32 128, 64
      %67 = vsyncadd [#allocation4], %s66
      %s68 = sshll.u32 [#allocation7], 4
      %s69 = int_to_ptr.vmem [resolvable:$true] %s68
      %74 = dma.vmem_to_hbm [thread:$0]  %s69, 64, %s2, [#allocation4], 64, 64, 4
    $region21: #{tpu_custom_call.1} parent=1 // pred_fallthru
      _
    // Predicated region
    $region22: #{tpu_custom_call.1} parent=1 // pred_check
      _
    $region23: #{tpu_custom_call.1} parent=1 // pred_check_branch
      %76 = sbr.rel (0) target = $region25
    $region24: #{tpu_custom_call.1} parent=1 // pred_region
      %77 = dma.done [#allocation4], 128
    $region25: #{tpu_custom_call.1} parent=1 // pred_fallthru
      _
    %78 = vsyncpa [#allocation3], 1
    %79 = vsyncpa [#allocation6], 1
    %80 = vsyncpa [#allocation4], 1

</llo_original>
